<compile_context>
chip_gen: v5e
topology: v5e:2x2
jax: 0.10.0
libtpu: 0.0.40
codegen_flags: <defaults>
</compile_context>

<pallas_src>
import jax
import jax.numpy as jnp
from jax.experimental import pallas as pl
from jax.experimental.pallas import tpu as pltpu


def _round_up(x, m):
    return (x + m - 1) // m * m


def emb_char_kernel(word_ref, cid_ref, wrow_ref, bct_ref, wpw_ref, wpc_ref,
                    wgt_ref, bgt_ref, out_ref):
    f32 = jnp.float32
    TM = out_ref.shape[0]
    H = out_ref.shape[1]
    CL = cid_ref.shape[1]
    CVp = wrow_ref.shape[1]
    WH = wrow_ref.shape[2]          # W_out * H  (lane-dense, 128 here)
    W_out = WH // H

    # --- char CNN: gather + conv fused as exact one-hot banded matmuls -------
    # onehot_p[n, v] = (char_ids[n, p] == v);  Wrow[p][v, w*H+h] holds
    # (char_vectors @ conv_w[p-w])[v, h] for every window w that touches char
    # position p, so  sum_p onehot_p @ Wrow[p]  == all W_out conv windows.
    vocab_iota = jax.lax.broadcasted_iota(jnp.int32, (TM, CVp), 1)
    conv = jnp.zeros((TM, WH), f32)
    for p in range(CL):
        onehot = jnp.where(cid_ref[:, p:p + 1] == vocab_iota, 1.0, 0.0)  # (TM, CVp) f32
        conv = conv + jnp.dot(onehot, wrow_ref[p], preferred_element_type=f32)
    conv = jnp.maximum(conv + bct_ref[...], 0.0)                         # (TM, W_out*H)

    # max-pool over the W_out window positions via static lane slices
    char_max = conv[:, 0:H]
    for w in range(1, W_out):
        char_max = jnp.maximum(char_max, conv[:, w * H:(w + 1) * H])

    # --- bias-free projection, split into two dots (no lane-axis concat) -----
    word = word_ref[...].astype(f32)                                     # bf16 -> f32
    h = (jnp.dot(word, wpw_ref[...], preferred_element_type=f32)
         + jnp.dot(char_max, wpc_ref[...], preferred_element_type=f32))

    # --- 2-layer highway encoder; gate+transform fused into one matmul/layer -
    num_layers = wgt_ref.shape[0]
    for layer in range(num_layers):
        gt = (jnp.dot(h, wgt_ref[layer], preferred_element_type=f32)
              + bgt_ref[layer])                                          # (TM, 2H)
        g = jax.nn.sigmoid(gt[:, :H])
        t = jnp.maximum(gt[:, H:], 0.0)
        h = g * t + (1.0 - g) * h

    out_ref[...] = h.astype(out_ref.dtype)


def embedding_with_char(word_ids, char_ids, params, *, tm=1024):
    """word_ids: (B, S) int32, char_ids: (B, S, CL) int32 -> (B, S, H) f32."""
    word_vectors = params["word_vectors"]    # (V, WD)
    char_vectors = params["char_vectors"]    # (CV, CD)
    wc = params["conv_w"]                    # (K, CD, H)
    bc = params["conv_b"]                    # (1, H)
    wp = params["proj_w"]                    # (WD+H, H)
    wg = params["hwy_gate_w"]                # (L, H, H)
    bg = params["hwy_gate_b"]                # (L, H)
    wt = params["hwy_trans_w"]               # (L, H, H)
    bt = params["hwy_trans_b"]               # (L, H)

    B, S = word_ids.shape
    CL = char_ids.shape[-1]
    WD = word_vectors.shape[1]
    CV, CD = char_vectors.shape
    K, _, H = wc.shape
    W_out = CL - K + 1
    n_layers = wg.shape[0]
    N = B * S
    f32 = jnp.float32
    CVp = _round_up(CV, 8)                   # pad char-vocab axis for clean tiling

    # --- host-side weight preprocessing (tiny, done once) --------------------
    # Effective per-tap weight (char vocab -> hidden): Wv[k] = char_vectors @ wc[k]
    wv_k = jnp.einsum("vc,kch->kvh", char_vectors.astype(f32), wc.astype(f32),
                      precision=jax.lax.Precision.HIGHEST)               # (K, CV, H)
    # Banded per-char-position weight: Wrow[p][:, w*H:(w+1)*H] = Wv[p-w] if 0<=p-w<K
    wrow = jnp.zeros((CL, CVp, W_out * H), f32)
    for k in range(K):
        for w in range(W_out):
            wrow = wrow.at[w + k, :CV, w * H:(w + 1) * H].set(wv_k[k])
    bct = jnp.tile(bc.reshape(1, H).astype(f32), (1, W_out))             # (1, W_out*H)

    wp_w = wp[:WD].astype(f32)               # (WD, H)
    wp_c = wp[WD:].astype(f32)               # (H, H)
    wgt = jnp.concatenate([wg, wt], axis=-1).astype(f32)                 # (L, H, 2H)
    bgt = jnp.concatenate([bg, bt], axis=-1).astype(f32).reshape(n_layers, 1, 2 * H)

    # --- pad the int32 id arrays (cheap), NOT the f32/bf16 activations -------
    tm_eff = min(tm, _round_up(N, 16))
    N_pad = _round_up(N, tm_eff)
    word_ids_flat = word_ids.reshape(N).astype(jnp.int32)
    char_ids_flat = char_ids.reshape(N, CL).astype(jnp.int32)
    if N_pad != N:
        pad = N_pad - N
        word_ids_flat = jnp.pad(word_ids_flat, (0, pad))                 # id 0 is valid
        char_ids_flat = jnp.pad(char_ids_flat, ((0, pad), (0, 0)))

    # Word gather stays in plain JAX (large vocab tables live in HBM); stream bf16.
    word_emb = jnp.take(word_vectors.astype(jnp.bfloat16), word_ids_flat, axis=0)

    grid = (N_pad // tm_eff,)
    out = pl.pallas_call(
        emb_char_kernel,
        out_shape=jax.ShapeDtypeStruct((N_pad, H), f32),
        grid_spec=pltpu.PrefetchScalarGridSpec(
            num_scalar_prefetch=0,
            grid=grid,
            in_specs=[
                pl.BlockSpec((tm_eff, WD), lambda i: (i, 0)),            # word_emb (bf16)
                pl.BlockSpec((tm_eff, CL), lambda i: (i, 0)),            # char ids (int32)
                pl.BlockSpec((CL, CVp, W_out * H), lambda i: (0, 0, 0)), # banded conv weight
                pl.BlockSpec((1, W_out * H), lambda i: (0, 0)),          # conv bias (tiled)
                pl.BlockSpec((WD, H), lambda i: (0, 0)),                 # word proj
                pl.BlockSpec((H, H), lambda i: (0, 0)),                  # char proj
                pl.BlockSpec((n_layers, H, 2 * H), lambda i: (0, 0, 0)), # highway gate|trans W
                pl.BlockSpec((n_layers, 1, 2 * H), lambda i: (0, 0, 0)), # highway gate|trans b
            ],
            out_specs=pl.BlockSpec((tm_eff, H), lambda i: (i, 0)),
        ),
        compiler_params=pltpu.CompilerParams(
            dimension_semantics=("parallel",)),
    )(word_emb, char_ids_flat, wrow, bct, wp_w, wp_c, wgt, bgt)
    return out[:N].reshape(B, S, H)


def reference_forward(word_ids, char_ids, params):
    """Pure-JAX reference mirroring the PyTorch forward (eval mode, f32)."""
    wv, cv = params["word_vectors"], params["char_vectors"]
    wc, bc = params["conv_w"], params["conv_b"]
    wp = params["proj_w"]
    wg, bg = params["hwy_gate_w"], params["hwy_gate_b"]
    wt, bt = params["hwy_trans_w"], params["hwy_trans_b"]

    word_emb = wv[word_ids]                       # (B, S, WD)
    char_emb = cv[char_ids]                       # (B, S, CL, CD)
    K = wc.shape[0]
    CL = char_emb.shape[2]
    outs = []
    for w in range(CL - K + 1):
        acc = bc[0]
        for k in range(K):
            acc = acc + jnp.einsum("bsc,ch->bsh", char_emb[:, :, w + k, :], wc[k])
        outs.append(jnp.maximum(acc, 0.0))
    char_feat = jnp.max(jnp.stack(outs, axis=-1), axis=-1)       # (B, S, H)
    emb = jnp.concatenate([word_emb, char_feat], axis=-1)
    h = jnp.einsum("bsd,dh->bsh", emb, wp)
    for layer in range(wg.shape[0]):
        g = jax.nn.sigmoid(jnp.einsum("bsh,hk->bsk", h, wg[layer]) + bg[layer])
        t = jnp.maximum(jnp.einsum("bsh,hk->bsk", h, wt[layer]) + bt[layer], 0.0)
        h = g * t + (1.0 - g) * h
    return h


if __name__ == "__main__":
    key = jax.random.PRNGKey(0)
    B, S, CL = 2, 8, 8            # batch, sequence, chars-per-word
    V, CV = 50, 30                # word vocab, char vocab
    WD, CD, H, K = 64, 8, 32, 5   # word dim, char dim, hidden, conv width

    keys = jax.random.split(key, 12)
    params = {
        "word_vectors": jax.random.normal(keys[0], (V, WD), jnp.float32) * 0.1,
        "char_vectors": jax.random.normal(keys[1], (CV, CD), jnp.float32) * 0.1,
        "conv_w": jax.random.normal(keys[2], (K, CD, H), jnp.float32) * 0.1,
        "conv_b": jax.random.normal(keys[3], (1, H), jnp.float32) * 0.1,
        "proj_w": jax.random.normal(keys[4], (WD + H, H), jnp.float32) * 0.1,
        "hwy_gate_w": jax.random.normal(keys[5], (2, H, H), jnp.float32) * 0.1,
        "hwy_gate_b": jax.random.normal(keys[6], (2, H), jnp.float32) * 0.1,
        "hwy_trans_w": jax.random.normal(keys[7], (2, H, H), jnp.float32) * 0.1,
        "hwy_trans_b": jax.random.normal(keys[8], (2, H), jnp.float32) * 0.1,
    }
    word_ids = jax.random.randint(keys[9], (B, S), 0, V, jnp.int32)
    char_ids = jax.random.randint(keys[10], (B, S, CL), 0, CV, jnp.int32)

    out = embedding_with_char(word_ids, char_ids, params)
    out = jax.block_until_ready(out)
    assert out.shape == (B, S, H)

    # Tight check against a reference that uses the same bf16-rounded word
    # embedding table the kernel streams (isolates the intentional bf16
    # streaming from any real math bug) ...
    params_bf16w = dict(params)
    params_bf16w["word_vectors"] = (
        params["word_vectors"].astype(jnp.bfloat16).astype(jnp.float32))
    ref_bf16w = jax.block_until_ready(reference_forward(word_ids, char_ids, params_bf16w))
    assert jnp.allclose(out, ref_bf16w, atol=2e-3, rtol=2e-3), "mismatch vs bf16-word reference"

    # ... and a looser check against the pure-f32 PyTorch-equivalent reference
    # (gap is solely the bf16 word-embedding stream).
    ref_f32 = jax.block_until_ready(reference_forward(word_ids, char_ids, params))
    assert jnp.allclose(out, ref_f32, atol=2e-2, rtol=2e-2), "mismatch vs f32 reference"

    print("KERNEL_OK")
</pallas_src>

<mosaic_0001>
module attributes {stable_mosaic.version = 11 : i64} {
  func.func @emb_char_kernel(%arg0: i32, %arg1: memref<16x64xbf16, #tpu.memory_space<vmem>>, %arg2: memref<16x8xi32, #tpu.memory_space<vmem>>, %arg3: memref<8x32x128xf32, #tpu.memory_space<vmem>>, %arg4: memref<1x128xf32, #tpu.memory_space<vmem>>, %arg5: memref<64x32xf32, #tpu.memory_space<vmem>>, %arg6: memref<32x32xf32, #tpu.memory_space<vmem>>, %arg7: memref<2x32x64xf32, #tpu.memory_space<vmem>>, %arg8: memref<2x1x64xf32, #tpu.memory_space<vmem>>, %arg9: memref<16x32xf32, #tpu.memory_space<vmem>>) attributes {dimension_semantics = [#tpu.dimension_semantics<parallel>], iteration_bounds = array<i64: 1>, scalar_prefetch = 0 : i64, scratch_operands = 0 : i64, tpu.core_type = #tpu.core_type<tc>, window_params = [{transform_indices = @transform_0, window_bounds = array<i64: 16, 64>}, {transform_indices = @transform_1, window_bounds = array<i64: 16, 8>}, {pipeline_mode = #tpu.pipeline_mode<synchronous>, transform_indices = @transform_2, window_bounds = array<i64: 8, 32, 128>}, {pipeline_mode = #tpu.pipeline_mode<synchronous>, transform_indices = @transform_3, window_bounds = array<i64: 1, 128>}, {pipeline_mode = #tpu.pipeline_mode<synchronous>, transform_indices = @transform_4, window_bounds = array<i64: 64, 32>}, {pipeline_mode = #tpu.pipeline_mode<synchronous>, transform_indices = @transform_5, window_bounds = array<i64: 32, 32>}, {pipeline_mode = #tpu.pipeline_mode<synchronous>, transform_indices = @transform_6, window_bounds = array<i64: 2, 32, 64>}, {pipeline_mode = #tpu.pipeline_mode<synchronous>, transform_indices = @transform_7, window_bounds = array<i64: 2, 1, 64>}, {transform_indices = @transform_8, window_bounds = array<i64: 16, 32>}]} {
    %0 = tpu.iota {dimensions = array<i32: 1>} : vector<16x32xi32>
    %cst = arith.constant 0.000000e+00 : f32
    %1 = vector.broadcast %cst : f32 to vector<16x128xf32>
    %c0 = arith.constant 0 : index
    %c0_0 = arith.constant 0 : index
    %2 = vector.load %arg2[%c0, %c0_0] : memref<16x8xi32, #tpu.memory_space<vmem>>, vector<16x1xi32>
    %3 = vector.broadcast %2 : vector<16x1xi32> to vector<16x32xi32>
    %4 = arith.cmpi eq, %3, %0 : vector<16x32xi32>
    %cst_1 = arith.constant 1.000000e+00 : f32
    %cst_2 = arith.constant 0.000000e+00 : f32
    %5 = vector.broadcast %cst_1 : f32 to vector<16x32xf32>
    %6 = vector.broadcast %cst_2 : f32 to vector<16x32xf32>
    %7 = arith.select %4, %5, %6 : vector<16x32xi1>, vector<16x32xf32>
    %c0_3 = arith.constant 0 : index
    %c0_4 = arith.constant 0 : index
    %c0_5 = arith.constant 0 : index
    %8 = vector.load %arg3[%c0_3, %c0_4, %c0_5] : memref<8x32x128xf32, #tpu.memory_space<vmem>>, vector<1x32x128xf32>
    %9 = vector.shape_cast %8 : vector<1x32x128xf32> to vector<32x128xf32>
    %cst_6 = arith.constant dense<0.000000e+00> : vector<16x128xf32>
    %10 = tpu.matmul %7, %9, %cst_6 {dimension_numbers = #tpu.dot_dimension_numbers<[1], [0], [0], [1], [0, 0, 1, 1], [], []>} : vector<16x32xf32>, vector<32x128xf32>, vector<16x128xf32> -> vector<16x128xf32>
    %11 = arith.addf %1, %10 : vector<16x128xf32>
    %c0_7 = arith.constant 0 : index
    %c1 = arith.constant 1 : index
    %12 = vector.load %arg2[%c0_7, %c1] : memref<16x8xi32, #tpu.memory_space<vmem>>, vector<16x1xi32>
    %13 = vector.broadcast %12 : vector<16x1xi32> to vector<16x32xi32>
    %14 = arith.cmpi eq, %13, %0 : vector<16x32xi32>
    %cst_8 = arith.constant 1.000000e+00 : f32
    %cst_9 = arith.constant 0.000000e+00 : f32
    %15 = vector.broadcast %cst_8 : f32 to vector<16x32xf32>
    %16 = vector.broadcast %cst_9 : f32 to vector<16x32xf32>
    %17 = arith.select %14, %15, %16 : vector<16x32xi1>, vector<16x32xf32>
    %c1_10 = arith.constant 1 : index
    %c0_11 = arith.constant 0 : index
    %c0_12 = arith.constant 0 : index
    %18 = vector.load %arg3[%c1_10, %c0_11, %c0_12] : memref<8x32x128xf32, #tpu.memory_space<vmem>>, vector<1x32x128xf32>
    %19 = vector.shape_cast %18 : vector<1x32x128xf32> to vector<32x128xf32>
    %cst_13 = arith.constant dense<0.000000e+00> : vector<16x128xf32>
    %20 = tpu.matmul %17, %19, %cst_13 {dimension_numbers = #tpu.dot_dimension_numbers<[1], [0], [0], [1], [0, 0, 1, 1], [], []>} : vector<16x32xf32>, vector<32x128xf32>, vector<16x128xf32> -> vector<16x128xf32>
    %21 = arith.addf %11, %20 : vector<16x128xf32>
    %c0_14 = arith.constant 0 : index
    %c2 = arith.constant 2 : index
    %22 = vector.load %arg2[%c0_14, %c2] : memref<16x8xi32, #tpu.memory_space<vmem>>, vector<16x1xi32>
    %23 = vector.broadcast %22 : vector<16x1xi32> to vector<16x32xi32>
    %24 = arith.cmpi eq, %23, %0 : vector<16x32xi32>
    %cst_15 = arith.constant 1.000000e+00 : f32
    %cst_16 = arith.constant 0.000000e+00 : f32
    %25 = vector.broadcast %cst_15 : f32 to vector<16x32xf32>
    %26 = vector.broadcast %cst_16 : f32 to vector<16x32xf32>
    %27 = arith.select %24, %25, %26 : vector<16x32xi1>, vector<16x32xf32>
    %c2_17 = arith.constant 2 : index
    %c0_18 = arith.constant 0 : index
    %c0_19 = arith.constant 0 : index
    %28 = vector.load %arg3[%c2_17, %c0_18, %c0_19] : memref<8x32x128xf32, #tpu.memory_space<vmem>>, vector<1x32x128xf32>
    %29 = vector.shape_cast %28 : vector<1x32x128xf32> to vector<32x128xf32>
    %cst_20 = arith.constant dense<0.000000e+00> : vector<16x128xf32>
    %30 = tpu.matmul %27, %29, %cst_20 {dimension_numbers = #tpu.dot_dimension_numbers<[1], [0], [0], [1], [0, 0, 1, 1], [], []>} : vector<16x32xf32>, vector<32x128xf32>, vector<16x128xf32> -> vector<16x128xf32>
    %31 = arith.addf %21, %30 : vector<16x128xf32>
    %c0_21 = arith.constant 0 : index
    %c3 = arith.constant 3 : index
    %32 = vector.load %arg2[%c0_21, %c3] : memref<16x8xi32, #tpu.memory_space<vmem>>, vector<16x1xi32>
    %33 = vector.broadcast %32 : vector<16x1xi32> to vector<16x32xi32>
    %34 = arith.cmpi eq, %33, %0 : vector<16x32xi32>
    %cst_22 = arith.constant 1.000000e+00 : f32
    %cst_23 = arith.constant 0.000000e+00 : f32
    %35 = vector.broadcast %cst_22 : f32 to vector<16x32xf32>
    %36 = vector.broadcast %cst_23 : f32 to vector<16x32xf32>
    %37 = arith.select %34, %35, %36 : vector<16x32xi1>, vector<16x32xf32>
    %c3_24 = arith.constant 3 : index
    %c0_25 = arith.constant 0 : index
    %c0_26 = arith.constant 0 : index
    %38 = vector.load %arg3[%c3_24, %c0_25, %c0_26] : memref<8x32x128xf32, #tpu.memory_space<vmem>>, vector<1x32x128xf32>
    %39 = vector.shape_cast %38 : vector<1x32x128xf32> to vector<32x128xf32>
    %cst_27 = arith.constant dense<0.000000e+00> : vector<16x128xf32>
    %40 = tpu.matmul %37, %39, %cst_27 {dimension_numbers = #tpu.dot_dimension_numbers<[1], [0], [0], [1], [0, 0, 1, 1], [], []>} : vector<16x32xf32>, vector<32x128xf32>, vector<16x128xf32> -> vector<16x128xf32>
    %41 = arith.addf %31, %40 : vector<16x128xf32>
    %c0_28 = arith.constant 0 : index
    %c4 = arith.constant 4 : index
    %42 = vector.load %arg2[%c0_28, %c4] : memref<16x8xi32, #tpu.memory_space<vmem>>, vector<16x1xi32>
    %43 = vector.broadcast %42 : vector<16x1xi32> to vector<16x32xi32>
    %44 = arith.cmpi eq, %43, %0 : vector<16x32xi32>
    %cst_29 = arith.constant 1.000000e+00 : f32
    %cst_30 = arith.constant 0.000000e+00 : f32
    %45 = vector.broadcast %cst_29 : f32 to vector<16x32xf32>
    %46 = vector.broadcast %cst_30 : f32 to vector<16x32xf32>
    %47 = arith.select %44, %45, %46 : vector<16x32xi1>, vector<16x32xf32>
    %c4_31 = arith.constant 4 : index
    %c0_32 = arith.constant 0 : index
    %c0_33 = arith.constant 0 : index
    %48 = vector.load %arg3[%c4_31, %c0_32, %c0_33] : memref<8x32x128xf32, #tpu.memory_space<vmem>>, vector<1x32x128xf32>
    %49 = vector.shape_cast %48 : vector<1x32x128xf32> to vector<32x128xf32>
    %cst_34 = arith.constant dense<0.000000e+00> : vector<16x128xf32>
    %50 = tpu.matmul %47, %49, %cst_34 {dimension_numbers = #tpu.dot_dimension_numbers<[1], [0], [0], [1], [0, 0, 1, 1], [], []>} : vector<16x32xf32>, vector<32x128xf32>, vector<16x128xf32> -> vector<16x128xf32>
    %51 = arith.addf %41, %50 : vector<16x128xf32>
    %c0_35 = arith.constant 0 : index
    %c5 = arith.constant 5 : index
    %52 = vector.load %arg2[%c0_35, %c5] : memref<16x8xi32, #tpu.memory_space<vmem>>, vector<16x1xi32>
    %53 = vector.broadcast %52 : vector<16x1xi32> to vector<16x32xi32>
    %54 = arith.cmpi eq, %53, %0 : vector<16x32xi32>
    %cst_36 = arith.constant 1.000000e+00 : f32
    %cst_37 = arith.constant 0.000000e+00 : f32
    %55 = vector.broadcast %cst_36 : f32 to vector<16x32xf32>
    %56 = vector.broadcast %cst_37 : f32 to vector<16x32xf32>
    %57 = arith.select %54, %55, %56 : vector<16x32xi1>, vector<16x32xf32>
    %c5_38 = arith.constant 5 : index
    %c0_39 = arith.constant 0 : index
    %c0_40 = arith.constant 0 : index
    %58 = vector.load %arg3[%c5_38, %c0_39, %c0_40] : memref<8x32x128xf32, #tpu.memory_space<vmem>>, vector<1x32x128xf32>
    %59 = vector.shape_cast %58 : vector<1x32x128xf32> to vector<32x128xf32>
    %cst_41 = arith.constant dense<0.000000e+00> : vector<16x128xf32>
    %60 = tpu.matmul %57, %59, %cst_41 {dimension_numbers = #tpu.dot_dimension_numbers<[1], [0], [0], [1], [0, 0, 1, 1], [], []>} : vector<16x32xf32>, vector<32x128xf32>, vector<16x128xf32> -> vector<16x128xf32>
    %61 = arith.addf %51, %60 : vector<16x128xf32>
    %c0_42 = arith.constant 0 : index
    %c6 = arith.constant 6 : index
    %62 = vector.load %arg2[%c0_42, %c6] : memref<16x8xi32, #tpu.memory_space<vmem>>, vector<16x1xi32>
    %63 = vector.broadcast %62 : vector<16x1xi32> to vector<16x32xi32>
    %64 = arith.cmpi eq, %63, %0 : vector<16x32xi32>
    %cst_43 = arith.constant 1.000000e+00 : f32
    %cst_44 = arith.constant 0.000000e+00 : f32
    %65 = vector.broadcast %cst_43 : f32 to vector<16x32xf32>
    %66 = vector.broadcast %cst_44 : f32 to vector<16x32xf32>
    %67 = arith.select %64, %65, %66 : vector<16x32xi1>, vector<16x32xf32>
    %c6_45 = arith.constant 6 : index
    %c0_46 = arith.constant 0 : index
    %c0_47 = arith.constant 0 : index
    %68 = vector.load %arg3[%c6_45, %c0_46, %c0_47] : memref<8x32x128xf32, #tpu.memory_space<vmem>>, vector<1x32x128xf32>
    %69 = vector.shape_cast %68 : vector<1x32x128xf32> to vector<32x128xf32>
    %cst_48 = arith.constant dense<0.000000e+00> : vector<16x128xf32>
    %70 = tpu.matmul %67, %69, %cst_48 {dimension_numbers = #tpu.dot_dimension_numbers<[1], [0], [0], [1], [0, 0, 1, 1], [], []>} : vector<16x32xf32>, vector<32x128xf32>, vector<16x128xf32> -> vector<16x128xf32>
    %71 = arith.addf %61, %70 : vector<16x128xf32>
    %c0_49 = arith.constant 0 : index
    %c7 = arith.constant 7 : index
    %72 = vector.load %arg2[%c0_49, %c7] : memref<16x8xi32, #tpu.memory_space<vmem>>, vector<16x1xi32>
    %73 = vector.broadcast %72 : vector<16x1xi32> to vector<16x32xi32>
    %74 = arith.cmpi eq, %73, %0 : vector<16x32xi32>
    %cst_50 = arith.constant 1.000000e+00 : f32
    %cst_51 = arith.constant 0.000000e+00 : f32
    %75 = vector.broadcast %cst_50 : f32 to vector<16x32xf32>
    %76 = vector.broadcast %cst_51 : f32 to vector<16x32xf32>
    %77 = arith.select %74, %75, %76 : vector<16x32xi1>, vector<16x32xf32>
    %c7_52 = arith.constant 7 : index
    %c0_53 = arith.constant 0 : index
    %c0_54 = arith.constant 0 : index
    %78 = vector.load %arg3[%c7_52, %c0_53, %c0_54] : memref<8x32x128xf32, #tpu.memory_space<vmem>>, vector<1x32x128xf32>
    %79 = vector.shape_cast %78 : vector<1x32x128xf32> to vector<32x128xf32>
    %cst_55 = arith.constant dense<0.000000e+00> : vector<16x128xf32>
    %80 = tpu.matmul %77, %79, %cst_55 {dimension_numbers = #tpu.dot_dimension_numbers<[1], [0], [0], [1], [0, 0, 1, 1], [], []>} : vector<16x32xf32>, vector<32x128xf32>, vector<16x128xf32> -> vector<16x128xf32>
    %81 = arith.addf %71, %80 : vector<16x128xf32>
    %c0_56 = arith.constant 0 : index
    %c0_57 = arith.constant 0 : index
    %82 = vector.load %arg4[%c0_56, %c0_57] : memref<1x128xf32, #tpu.memory_space<vmem>>, vector<1x128xf32>
    %83 = vector.broadcast %82 : vector<1x128xf32> to vector<16x128xf32>
    %84 = arith.addf %81, %83 : vector<16x128xf32>
    %cst_58 = arith.constant 0.000000e+00 : f32
    %85 = vector.broadcast %cst_58 : f32 to vector<16x128xf32>
    %86 = arith.maximumf %84, %85 : vector<16x128xf32>
    %87 = vector.extract_strided_slice %86 {offsets = [0, 0], sizes = [16, 32], strides = [1, 1]} : vector<16x128xf32> to vector<16x32xf32>
    %88 = vector.extract_strided_slice %86 {offsets = [0, 32], sizes = [16, 32], strides = [1, 1]} : vector<16x128xf32> to vector<16x32xf32>
    %89 = arith.maximumf %87, %88 : vector<16x32xf32>
    %90 = vector.extract_strided_slice %86 {offsets = [0, 64], sizes = [16, 32], strides = [1, 1]} : vector<16x128xf32> to vector<16x32xf32>
    %91 = arith.maximumf %89, %90 : vector<16x32xf32>
    %92 = vector.extract_strided_slice %86 {offsets = [0, 96], sizes = [16, 32], strides = [1, 1]} : vector<16x128xf32> to vector<16x32xf32>
    %93 = arith.maximumf %91, %92 : vector<16x32xf32>
    %c0_59 = arith.constant 0 : index
    %c0_60 = arith.constant 0 : index
    %94 = vector.load %arg1[%c0_59, %c0_60] : memref<16x64xbf16, #tpu.memory_space<vmem>>, vector<16x64xbf16>
    %95 = arith.extf %94 : vector<16x64xbf16> to vector<16x64xf32>
    %c0_61 = arith.constant 0 : index
    %c0_62 = arith.constant 0 : index
    %96 = vector.load %arg5[%c0_61, %c0_62] : memref<64x32xf32, #tpu.memory_space<vmem>>, vector<64x32xf32>
    %cst_63 = arith.constant dense<0.000000e+00> : vector<16x32xf32>
    %97 = tpu.matmul %95, %96, %cst_63 {dimension_numbers = #tpu.dot_dimension_numbers<[1], [0], [0], [1], [0, 0, 1, 1], [], []>} : vector<16x64xf32>, vector<64x32xf32>, vector<16x32xf32> -> vector<16x32xf32>
    %c0_64 = arith.constant 0 : index
    %c0_65 = arith.constant 0 : index
    %98 = vector.load %arg6[%c0_64, %c0_65] : memref<32x32xf32, #tpu.memory_space<vmem>>, vector<32x32xf32>
    %cst_66 = arith.constant dense<0.000000e+00> : vector<16x32xf32>
    %99 = tpu.matmul %93, %98, %cst_66 {dimension_numbers = #tpu.dot_dimension_numbers<[1], [0], [0], [1], [0, 0, 1, 1], [], []>} : vector<16x32xf32>, vector<32x32xf32>, vector<16x32xf32> -> vector<16x32xf32>
    %100 = arith.addf %97, %99 : vector<16x32xf32>
    %c0_67 = arith.constant 0 : index
    %c0_68 = arith.constant 0 : index
    %c0_69 = arith.constant 0 : index
    %101 = vector.load %arg7[%c0_67, %c0_68, %c0_69] : memref<2x32x64xf32, #tpu.memory_space<vmem>>, vector<1x32x64xf32>
    %102 = vector.shape_cast %101 : vector<1x32x64xf32> to vector<32x64xf32>
    %cst_70 = arith.constant dense<0.000000e+00> : vector<16x64xf32>
    %103 = tpu.matmul %100, %102, %cst_70 {dimension_numbers = #tpu.dot_dimension_numbers<[1], [0], [0], [1], [0, 0, 1, 1], [], []>} : vector<16x32xf32>, vector<32x64xf32>, vector<16x64xf32> -> vector<16x64xf32>
    %c0_71 = arith.constant 0 : index
    %c0_72 = arith.constant 0 : index
    %c0_73 = arith.constant 0 : index
    %104 = vector.load %arg8[%c0_71, %c0_72, %c0_73] : memref<2x1x64xf32, #tpu.memory_space<vmem>>, vector<1x1x64xf32>
    %105 = vector.shape_cast %104 : vector<1x1x64xf32> to vector<1x64xf32>
    %106 = vector.broadcast %105 : vector<1x64xf32> to vector<16x64xf32>
    %107 = arith.addf %103, %106 : vector<16x64xf32>
    %108 = vector.extract_strided_slice %107 {offsets = [0, 0], sizes = [16, 32], strides = [1, 1]} : vector<16x64xf32> to vector<16x32xf32>
    %109 = arith.negf %108 : vector<16x32xf32>
    %110 = math.exp %109 : vector<16x32xf32>
    %cst_74 = arith.constant 1.000000e+00 : f32
    %111 = vector.broadcast %cst_74 : f32 to vector<16x32xf32>
    %112 = arith.addf %111, %110 : vector<16x32xf32>
    %113 = arith.divf %111, %112 : vector<16x32xf32>
    %114 = vector.extract_strided_slice %107 {offsets = [0, 32], sizes = [16, 32], strides = [1, 1]} : vector<16x64xf32> to vector<16x32xf32>
    %cst_75 = arith.constant 0.000000e+00 : f32
    %115 = vector.broadcast %cst_75 : f32 to vector<16x32xf32>
    %116 = arith.maximumf %114, %115 : vector<16x32xf32>
    %117 = arith.mulf %113, %116 : vector<16x32xf32>
    %cst_76 = arith.constant 1.000000e+00 : f32
    %118 = vector.broadcast %cst_76 : f32 to vector<16x32xf32>
    %119 = arith.subf %118, %113 : vector<16x32xf32>
    %120 = arith.mulf %119, %100 : vector<16x32xf32>
    %121 = arith.addf %117, %120 : vector<16x32xf32>
    %c1_77 = arith.constant 1 : index
    %c0_78 = arith.constant 0 : index
    %c0_79 = arith.constant 0 : index
    %122 = vector.load %arg7[%c1_77, %c0_78, %c0_79] : memref<2x32x64xf32, #tpu.memory_space<vmem>>, vector<1x32x64xf32>
    %123 = vector.shape_cast %122 : vector<1x32x64xf32> to vector<32x64xf32>
    %cst_80 = arith.constant dense<0.000000e+00> : vector<16x64xf32>
    %124 = tpu.matmul %121, %123, %cst_80 {dimension_numbers = #tpu.dot_dimension_numbers<[1], [0], [0], [1], [0, 0, 1, 1], [], []>} : vector<16x32xf32>, vector<32x64xf32>, vector<16x64xf32> -> vector<16x64xf32>
    %c1_81 = arith.constant 1 : index
    %c0_82 = arith.constant 0 : index
    %c0_83 = arith.constant 0 : index
    %125 = vector.load %arg8[%c1_81, %c0_82, %c0_83] : memref<2x1x64xf32, #tpu.memory_space<vmem>>, vector<1x1x64xf32>
    %126 = vector.shape_cast %125 : vector<1x1x64xf32> to vector<1x64xf32>
    %127 = vector.broadcast %126 : vector<1x64xf32> to vector<16x64xf32>
    %128 = arith.addf %124, %127 : vector<16x64xf32>
    %129 = vector.extract_strided_slice %128 {offsets = [0, 0], sizes = [16, 32], strides = [1, 1]} : vector<16x64xf32> to vector<16x32xf32>
    %130 = arith.negf %129 : vector<16x32xf32>
    %131 = math.exp %130 : vector<16x32xf32>
    %cst_84 = arith.constant 1.000000e+00 : f32
    %132 = vector.broadcast %cst_84 : f32 to vector<16x32xf32>
    %133 = arith.addf %132, %131 : vector<16x32xf32>
    %134 = arith.divf %132, %133 : vector<16x32xf32>
    %135 = vector.extract_strided_slice %128 {offsets = [0, 32], sizes = [16, 32], strides = [1, 1]} : vector<16x64xf32> to vector<16x32xf32>
    %cst_85 = arith.constant 0.000000e+00 : f32
    %136 = vector.broadcast %cst_85 : f32 to vector<16x32xf32>
    %137 = arith.maximumf %135, %136 : vector<16x32xf32>
    %138 = arith.mulf %134, %137 : vector<16x32xf32>
    %cst_86 = arith.constant 1.000000e+00 : f32
    %139 = vector.broadcast %cst_86 : f32 to vector<16x32xf32>
    %140 = arith.subf %139, %134 : vector<16x32xf32>
    %141 = arith.mulf %140, %121 : vector<16x32xf32>
    %142 = arith.addf %138, %141 : vector<16x32xf32>
    %c0_87 = arith.constant 0 : index
    %c0_88 = arith.constant 0 : index
    %143 = vector.load %arg9[%c0_87, %c0_88] : memref<16x32xf32, #tpu.memory_space<vmem>>, vector<16x32xf32>
    tpu.vector_store %arg9[%c0_87, %c0_88], %142 {strides = array<i32>} : memref<16x32xf32, #tpu.memory_space<vmem>>, vector<16x32xf32>,
    return
  }
  func.func @transform_0(%arg0: i32) -> (i32, i32) {
    %c0_i32 = arith.constant 0 : i32
    %c0_i32_0 = arith.constant 0 : i32
    return %arg0, %c0_i32 : i32, i32
  }
  func.func @transform_1(%arg0: i32) -> (i32, i32) {
    %c0_i32 = arith.constant 0 : i32
    %c0_i32_0 = arith.constant 0 : i32
    return %arg0, %c0_i32 : i32, i32
  }
  func.func @transform_2(%arg0: i32) -> (i32, i32, i32) {
    %c0_i32 = arith.constant 0 : i32
    %c0_i32_0 = arith.constant 0 : i32
    %c0_i32_1 = arith.constant 0 : i32
    %c0_i32_2 = arith.constant 0 : i32
    return %c0_i32, %c0_i32_0, %c0_i32_1 : i32, i32, i32
  }
  func.func @transform_3(%arg0: i32) -> (i32, i32) {
    %c0_i32 = arith.constant 0 : i32
    %c0_i32_0 = arith.constant 0 : i32
    %c0_i32_1 = arith.constant 0 : i32
    return %c0_i32, %c0_i32_0 : i32, i32
  }
  func.func @transform_4(%arg0: i32) -> (i32, i32) {
    %c0_i32 = arith.constant 0 : i32
    %c0_i32_0 = arith.constant 0 : i32
    %c0_i32_1 = arith.constant 0 : i32
    return %c0_i32, %c0_i32_0 : i32, i32
  }
  func.func @transform_5(%arg0: i32) -> (i32, i32) {
    %c0_i32 = arith.constant 0 : i32
    %c0_i32_0 = arith.constant 0 : i32
    %c0_i32_1 = arith.constant 0 : i32
    return %c0_i32, %c0_i32_0 : i32, i32
  }
  func.func @transform_6(%arg0: i32) -> (i32, i32, i32) {
    %c0_i32 = arith.constant 0 : i32
    %c0_i32_0 = arith.constant 0 : i32
    %c0_i32_1 = arith.constant 0 : i32
    %c0_i32_2 = arith.constant 0 : i32
    return %c0_i32, %c0_i32_0, %c0_i32_1 : i32, i32, i32
  }
  func.func @transform_7(%arg0: i32) -> (i32, i32, i32) {
    %c0_i32 = arith.constant 0 : i32
    %c0_i32_0 = arith.constant 0 : i32
    %c0_i32_1 = arith.constant 0 : i32
    %c0_i32_2 = arith.constant 0 : i32
    return %c0_i32, %c0_i32_0, %c0_i32_1 : i32, i32, i32
  }
  func.func @transform_8(%arg0: i32) -> (i32, i32) {
    %c0_i32 = arith.constant 0 : i32
    %c0_i32_0 = arith.constant 0 : i32
    return %arg0, %c0_i32 : i32, i32
  }
}

</mosaic_0001>

<llo_original>
// kernel: tpu_custom_call.1
$region0: #{tpu_custom_call.1}
  #allocation0 [shape = 'u32[]', space=smem, size = 0x4, offset = 0x4, fixed_abs, tag = 'smem constant byte address 0x4 - core index']
  #allocation1 [shape = 'u32[72,128]{1,0:T(1,128)}', space=vmem, size = 0x9000, scoped, tag = 'internal scratch']
  %s0 = inlined_call_operand.vmem [shape: bf16[16,64], index: 0, kind: input, shape index: {}]
  %s1 = inlined_call_operand.vmem [shape: s32[16,8], index: 1, kind: input, shape index: {}]
  %s2 = inlined_call_operand.hbm [shape: f32[8,32,128], index: 2, kind: input, shape index: {}]
  %s3 = inlined_call_operand.vmem [shape: f32[1,128], index: 3, kind: input, shape index: {}]
  %s4 = inlined_call_operand.vmem [shape: f32[64,32], index: 4, kind: input, shape index: {}]
  %s5 = inlined_call_operand.vmem [shape: f32[32,32], index: 5, kind: input, shape index: {}]
  %s6 = inlined_call_operand.vmem [shape: f32[2,32,64], index: 6, kind: input, shape index: {}]
  %s7 = inlined_call_operand.vmem [shape: f32[2,1,64], index: 7, kind: input, shape index: {}]
  %s8 = inlined_call_operand.hbm [shape: f32[16,32], index: 8, kind: output, shape index: {}]
  %s9 = sld [smem:[#allocation0]]
  $region46: #{tpu_custom_call.1} parent=0
    _
  %s11 = ssub.s32 1, %s9
  %s12 = scalar_select 0, %s11, %s9
  $region1: #{tpu_custom_call.1} parent=0
    #allocation2 [shape = 'u8[131072]{0}', space=vmem, size = 0x20000, scoped, tag = 'input window, operand 2, single buffered']
    #allocation3 [shape = 's32[1]{0}', space=sflag, size = 0x4, scoped, tag = 'scoped memory for tpu_custom_call.1']
    #allocation4 [shape = 's32[1]{0}', space=sflag, size = 0x4, scoped, tag = 'scoped memory for tpu_custom_call.1']
    #allocation5 [shape = 'u8[8192]{0}', space=vmem, size = 0x2000, scoped, tag = 'output window, operand 0, single buffered']
    %13 = vsyncpa [#allocation3], 0
    %14 = vsyncpa [#allocation4], 0
    // Predicated region
    $region2: #{tpu_custom_call.1} parent=1 // pred_check
      _
    $region3: #{tpu_custom_call.1} parent=1 // pred_check_branch
      %16 = sbr.rel (0) target = $region5
    $region4: #{tpu_custom_call.1} parent=1 // pred_region
      _
    $region5: #{tpu_custom_call.1} parent=1 // pred_fallthru
      _
    // Predicated region
    $region6: #{tpu_custom_call.1} parent=1 // pred_check
      _
    $region7: #{tpu_custom_call.1} parent=1 // pred_check_branch
      %18 = sbr.rel (0) target = $region9
    $region8: #{tpu_custom_call.1} parent=1 // pred_region
      _
    $region9: #{tpu_custom_call.1} parent=1 // pred_fallthru
      _
    // Predicated region
    $region10: #{tpu_custom_call.1} parent=1 // pred_check
      _
    $region11: #{tpu_custom_call.1} parent=1 // pred_check_branch
      %20 = sbr.rel (0) target = $region13
    $region12: #{tpu_custom_call.1} parent=1 // pred_region
      %22 = vsyncadd [#allocation3], 0
      %s23 = sshll.u32 %s2, 4
      %s24 = int_to_ptr.hbm [resolvable:$true] %s23
      %s25 = sshll.u32 [#allocation2], 4
      %s26 = int_to_ptr.vmem [resolvable:$true] %s25
      %31 = dma.hbm_to_vmem [thread:$0]  %s24, 4096, %s26, [#allocation3], 128, 128, 8
    $region13: #{tpu_custom_call.1} parent=1 // pred_fallthru
      _
    // Predicated region
    $region14: #{tpu_custom_call.1} parent=1 // pred_check
      _
    $region15: #{tpu_custom_call.1} parent=1 // pred_check_branch
      %33 = sbr.rel (0) target = $region17
    $region16: #{tpu_custom_call.1} parent=1 // pred_region
      _
    $region17: #{tpu_custom_call.1} parent=1 // pred_fallthru
      _
    // Predicated region
    $region18: #{tpu_custom_call.1} parent=1 // pred_check
      _
    $region19: #{tpu_custom_call.1} parent=1 // pred_check_branch
      %35 = sbr.rel (0) target = $region21
    $region20: #{tpu_custom_call.1} parent=1 // pred_region
      _
    $region21: #{tpu_custom_call.1} parent=1 // pred_fallthru
      _
    // Predicated region
    $region22: #{tpu_custom_call.1} parent=1 // pred_check
      _
    $region23: #{tpu_custom_call.1} parent=1 // pred_check_branch
      %37 = sbr.rel (0) target = $region25
    $region24: #{tpu_custom_call.1} parent=1 // pred_region
      _
    $region25: #{tpu_custom_call.1} parent=1 // pred_fallthru
      _
    // Predicated region
    $region26: #{tpu_custom_call.1} parent=1 // pred_check
      _
    $region27: #{tpu_custom_call.1} parent=1 // pred_check_branch
      %39 = sbr.rel (0) target = $region29
    $region28: #{tpu_custom_call.1} parent=1 // pred_region
      _
    $region29: #{tpu_custom_call.1} parent=1 // pred_fallthru
      _
    // Predicated region
    $region30: #{tpu_custom_call.1} parent=1 // pred_check
      _
    $region31: #{tpu_custom_call.1} parent=1 // pred_check_branch
      %41 = sbr.rel (0) target = $region33
    $region32: #{tpu_custom_call.1} parent=1 // pred_region
      _
    $region33: #{tpu_custom_call.1} parent=1 // pred_fallthru
      _
    // Predicated region
    $region34: #{tpu_custom_call.1} parent=1 // pred_check
      _
    $region35: #{tpu_custom_call.1} parent=1 // pred_check_branch
      %43 = sbr.rel (0) target = $region37
    $region36: #{tpu_custom_call.1} parent=1 // pred_region
      %45 = dma.done [#allocation3], 4096
    $region37: #{tpu_custom_call.1} parent=1 // pred_fallthru
      _
    %v46 = vlaneseq
    %v47 = vand.u32 %v46, 127
    %v48 = vld [vmem:[%s1] sm:$0xff]
    %v49 = vld [vmem:[%s1 + $0x8] sm:$0xff]
    %50 = vset.pattern.permute.xlu0 0
    %51 = vperm.xlu0 %50, %v48
    %v52 = vpop.permute.xlu0 %51
    %53 = vset.pattern.permute.xlu0 0
    %54 = vperm.xlu0 %53, %v49
    %v55 = vpop.permute.xlu0 %54
    %vm56 = vcmp.eq.s32.totalorder %v52, %v47
    %vm57 = vcmp.eq.s32.totalorder %v55, %v47
    %v58 = vsel %vm56, 1.0, 0.0
    %v59 = vsel %vm57, 1.0, 0.0
    %v60 = vld [vmem:[#allocation2] sm:$0xff]
    %v61 = vld [vmem:[#allocation2 + $0x8] sm:$0xff]
    %v62 = vld [vmem:[#allocation2 + $0x10] sm:$0xff]
    %v63 = vld [vmem:[#allocation2 + $0x18] sm:$0xff]
    %64 = vset.pattern.permute.xlu0 1
    %65 = vperm.xlu0 %64, %v48
    %v66 = vpop.permute.xlu0 %65
    %67 = vset.pattern.permute.xlu0 1
    %68 = vperm.xlu0 %67, %v49
    %v69 = vpop.permute.xlu0 %68
    %vm70 = vcmp.eq.s32.totalorder %v66, %v47
    %vm71 = vcmp.eq.s32.totalorder %v69, %v47
    %v72 = vsel %vm70, 1.0, 0.0
    %v73 = vsel %vm71, 1.0, 0.0
    %s74 = scalar_lea.vmem [#allocation2], 32
    %v75 = vld [vmem:[%s74] sm:$0xff]
    %v76 = vld [vmem:[%s74 + $0x8] sm:$0xff]
    %v77 = vld [vmem:[%s74 + $0x10] sm:$0xff]
    %v78 = vld [vmem:[%s74 + $0x18] sm:$0xff]
    %vm79 = vcmask 261120
    %v81 = vsel %vm79, %v72, 0
    %v84 = vsel %vm79, %v73, 0
    %86 = vmatpush.msra.mxu0 0.0
    %87 = vmatpush.msra.mxu0 0.0
    %88 = vmatpush.msra.mxu0 0.0
    %89 = vmatpush.msra.mxu0 0.0
    %90 = vmatpush.msra.mxu0 0.0
    %91 = vmatpush.msra.mxu0 0.0
    %92 = vmatpush.msra.mxu0 0.0
    %93 = vmatpush.msra.mxu0 0.0
    %94 = vmatpush.msra.mxu0 0.0
    %95 = vmatpush.msra.mxu0 0.0
    %96 = vmatpush.msra.mxu0 0.0
    %97 = vmatpush.msra.mxu0 0.0
    %98 = vmatpush.msra.mxu0 %v78
    %99 = vmatpush.msra.mxu0 %v77
    %100 = vmatpush.msra.mxu0 %v76
    %101 = vmatpush.msra.mxu0 %v75
    %102 = vmatmul.f32.gmra.mxu0 %v81
    %v103 = vpop.f32.mrf.mxu0
    %v104 = vadd.f32 0.0, %v103
    %105 = vmatmul.f32.gmra.mxu0 %v84
    %v106 = vpop.f32.mrf.mxu0
    %v107 = vadd.f32 0.0, %v106
    %108 = vdwg.mxu0
    %v110 = vsel %vm79, %v58, 0
    %v113 = vsel %vm79, %v59, 0
    %115 = vmatpush.msra.mxu0 0.0
    %116 = vmatpush.msra.mxu0 0.0
    %117 = vmatpush.msra.mxu0 0.0
    %118 = vmatpush.msra.mxu0 0.0
    %119 = vmatpush.msra.mxu0 0.0
    %120 = vmatpush.msra.mxu0 0.0
    %121 = vmatpush.msra.mxu0 0.0
    %122 = vmatpush.msra.mxu0 0.0
    %123 = vmatpush.msra.mxu0 0.0
    %124 = vmatpush.msra.mxu0 0.0
    %125 = vmatpush.msra.mxu0 0.0
    %126 = vmatpush.msra.mxu0 0.0
    %127 = vmatpush.msra.mxu0 %v63
    %128 = vmatpush.msra.mxu0 %v62
    %129 = vmatpush.msra.mxu0 %v61
    %130 = vmatpush.msra.mxu0 %v60
    %131 = vmatmul.f32.gmra.mxu0 %v110
    %v132 = vpop.f32.mrf.mxu0
    %v133 = vadd.f32 %v104, %v132
    %134 = vmatmul.f32.gmra.mxu0 %v113
    %v135 = vpop.f32.mrf.mxu0
    %v136 = vadd.f32 %v107, %v135
    %137 = vdwg.mxu0
    %138 = vset.pattern.permute.xlu0 2
    %139 = vperm.xlu0 %138, %v48
    %v140 = vpop.permute.xlu0 %139
    %141 = vset.pattern.permute.xlu0 2
    %142 = vperm.xlu0 %141, %v49
    %v143 = vpop.permute.xlu0 %142
    %vm144 = vcmp.eq.s32.totalorder %v140, %v47
    %vm145 = vcmp.eq.s32.totalorder %v143, %v47
    %v146 = vsel %vm144, 1.0, 0.0
    %v147 = vsel %vm145, 1.0, 0.0
    %s148 = scalar_lea.vmem [#allocation2], 64
    %v149 = vld [vmem:[%s148] sm:$0xff]
    %v150 = vld [vmem:[%s148 + $0x8] sm:$0xff]
    %v151 = vld [vmem:[%s148 + $0x10] sm:$0xff]
    %v152 = vld [vmem:[%s148 + $0x18] sm:$0xff]
    %v154 = vsel %vm79, %v146, 0
    %v157 = vsel %vm79, %v147, 0
    %159 = vmatpush.msra.mxu0 0.0
    %160 = vmatpush.msra.mxu0 0.0
    %161 = vmatpush.msra.mxu0 0.0
    %162 = vmatpush.msra.mxu0 0.0
    %163 = vmatpush.msra.mxu0 0.0
    %164 = vmatpush.msra.mxu0 0.0
    %165 = vmatpush.msra.mxu0 0.0
    %166 = vmatpush.msra.mxu0 0.0
    %167 = vmatpush.msra.mxu0 0.0
    %168 = vmatpush.msra.mxu0 0.0
    %169 = vmatpush.msra.mxu0 0.0
    %170 = vmatpush.msra.mxu0 0.0
    %171 = vmatpush.msra.mxu0 %v152
    %172 = vmatpush.msra.mxu0 %v151
    %173 = vmatpush.msra.mxu0 %v150
    %174 = vmatpush.msra.mxu0 %v149
    %175 = vmatmul.f32.gmra.mxu0 %v154
    %v176 = vpop.f32.mrf.mxu0
    %v177 = vadd.f32 0.0, %v176
    %178 = vmatmul.f32.gmra.mxu0 %v157
    %v179 = vpop.f32.mrf.mxu0
    %v180 = vadd.f32 0.0, %v179
    %181 = vdwg.mxu0
    %v182 = vadd.f32 %v133, %v177
    %v183 = vadd.f32 %v136, %v180
    %184 = vset.pattern.permute.xlu0 3
    %185 = vperm.xlu0 %184, %v48
    %v186 = vpop.permute.xlu0 %185
    %187 = vset.pattern.permute.xlu0 3
    %188 = vperm.xlu0 %187, %v49
    %v189 = vpop.permute.xlu0 %188
    %vm190 = vcmp.eq.s32.totalorder %v186, %v47
    %vm191 = vcmp.eq.s32.totalorder %v189, %v47
    %v192 = vsel %vm190, 1.0, 0.0
    %v193 = vsel %vm191, 1.0, 0.0
    %s194 = scalar_lea.vmem [#allocation2], 96
    %v195 = vld [vmem:[%s194] sm:$0xff]
    %v196 = vld [vmem:[%s194 + $0x8] sm:$0xff]
    %v197 = vld [vmem:[%s194 + $0x10] sm:$0xff]
    %v198 = vld [vmem:[%s194 + $0x18] sm:$0xff]
    %v200 = vsel %vm79, %v192, 0
    %v203 = vsel %vm79, %v193, 0
    %205 = vmatpush.msra.mxu0 0.0
    %206 = vmatpush.msra.mxu0 0.0
    %207 = vmatpush.msra.mxu0 0.0
    %208 = vmatpush.msra.mxu0 0.0
    %209 = vmatpush.msra.mxu0 0.0
    %210 = vmatpush.msra.mxu0 0.0
    %211 = vmatpush.msra.mxu0 0.0
    %212 = vmatpush.msra.mxu0 0.0
    %213 = vmatpush.msra.mxu0 0.0
    %214 = vmatpush.msra.mxu0 0.0
    %215 = vmatpush.msra.mxu0 0.0
    %216 = vmatpush.msra.mxu0 0.0
    %217 = vmatpush.msra.mxu0 %v198
    %218 = vmatpush.msra.mxu0 %v197
    %219 = vmatpush.msra.mxu0 %v196
    %220 = vmatpush.msra.mxu0 %v195
    %221 = vmatmul.f32.gmra.mxu0 %v200
    %v222 = vpop.f32.mrf.mxu0
    %v223 = vadd.f32 0.0, %v222
    %224 = vmatmul.f32.gmra.mxu0 %v203
    %v225 = vpop.f32.mrf.mxu0
    %v226 = vadd.f32 0.0, %v225
    %227 = vdwg.mxu0
    %v228 = vadd.f32 %v182, %v223
    %v229 = vadd.f32 %v183, %v226
    %230 = vset.pattern.permute.xlu0 4
    %231 = vperm.xlu0 %230, %v48
    %v232 = vpop.permute.xlu0 %231
    %233 = vset.pattern.permute.xlu0 4
    %234 = vperm.xlu0 %233, %v49
    %v235 = vpop.permute.xlu0 %234
    %vm236 = vcmp.eq.s32.totalorder %v232, %v47
    %vm237 = vcmp.eq.s32.totalorder %v235, %v47
    %v238 = vsel %vm236, 1.0, 0.0
    %v239 = vsel %vm237, 1.0, 0.0
    %s240 = scalar_lea.vmem [#allocation2], 128
    %v241 = vld [vmem:[%s240] sm:$0xff]
    %v242 = vld [vmem:[%s240 + $0x8] sm:$0xff]
    %v243 = vld [vmem:[%s240 + $0x10] sm:$0xff]
    %v244 = vld [vmem:[%s240 + $0x18] sm:$0xff]
    %v246 = vsel %vm79, %v238, 0
    %v249 = vsel %vm79, %v239, 0
    %251 = vmatpush.msra.mxu0 0.0
    %252 = vmatpush.msra.mxu0 0.0
    %253 = vmatpush.msra.mxu0 0.0
    %254 = vmatpush.msra.mxu0 0.0
    %255 = vmatpush.msra.mxu0 0.0
    %256 = vmatpush.msra.mxu0 0.0
    %257 = vmatpush.msra.mxu0 0.0
    %258 = vmatpush.msra.mxu0 0.0
    %259 = vmatpush.msra.mxu0 0.0
    %260 = vmatpush.msra.mxu0 0.0
    %261 = vmatpush.msra.mxu0 0.0
    %262 = vmatpush.msra.mxu0 0.0
    %263 = vmatpush.msra.mxu0 %v244
    %264 = vmatpush.msra.mxu0 %v243
    %265 = vmatpush.msra.mxu0 %v242
    %266 = vmatpush.msra.mxu0 %v241
    %267 = vmatmul.f32.gmra.mxu0 %v246
    %v268 = vpop.f32.mrf.mxu0
    %v269 = vadd.f32 0.0, %v268
    %270 = vmatmul.f32.gmra.mxu0 %v249
    %v271 = vpop.f32.mrf.mxu0
    %v272 = vadd.f32 0.0, %v271
    %273 = vdwg.mxu0
    %v274 = vadd.f32 %v228, %v269
    %v275 = vadd.f32 %v229, %v272
    %276 = vset.pattern.permute.xlu0 5
    %277 = vperm.xlu0 %276, %v48
    %v278 = vpop.permute.xlu0 %277
    %279 = vset.pattern.permute.xlu0 5
    %280 = vperm.xlu0 %279, %v49
    %v281 = vpop.permute.xlu0 %280
    %vm282 = vcmp.eq.s32.totalorder %v278, %v47
    %vm283 = vcmp.eq.s32.totalorder %v281, %v47
    %v284 = vsel %vm282, 1.0, 0.0
    %v285 = vsel %vm283, 1.0, 0.0
    %s286 = scalar_lea.vmem [#allocation2], 160
    %v287 = vld [vmem:[%s286] sm:$0xff]
    %v288 = vld [vmem:[%s286 + $0x8] sm:$0xff]
    %v289 = vld [vmem:[%s286 + $0x10] sm:$0xff]
    %v290 = vld [vmem:[%s286 + $0x18] sm:$0xff]
    %v292 = vsel %vm79, %v284, 0
    %v295 = vsel %vm79, %v285, 0
    %297 = vmatpush.msra.mxu0 0.0
    %298 = vmatpush.msra.mxu0 0.0
    %299 = vmatpush.msra.mxu0 0.0
    %300 = vmatpush.msra.mxu0 0.0
    %301 = vmatpush.msra.mxu0 0.0
    %302 = vmatpush.msra.mxu0 0.0
    %303 = vmatpush.msra.mxu0 0.0
    %304 = vmatpush.msra.mxu0 0.0
    %305 = vmatpush.msra.mxu0 0.0
    %306 = vmatpush.msra.mxu0 0.0
    %307 = vmatpush.msra.mxu0 0.0
    %308 = vmatpush.msra.mxu0 0.0
    %309 = vmatpush.msra.mxu0 %v290
    %310 = vmatpush.msra.mxu0 %v289
    %311 = vmatpush.msra.mxu0 %v288
    %312 = vmatpush.msra.mxu0 %v287
    %313 = vmatmul.f32.gmra.mxu0 %v292
    %v314 = vpop.f32.mrf.mxu0
    %v315 = vadd.f32 0.0, %v314
    %316 = vmatmul.f32.gmra.mxu0 %v295
    %v317 = vpop.f32.mrf.mxu0
    %v318 = vadd.f32 0.0, %v317
    %319 = vdwg.mxu0
    %v320 = vadd.f32 %v274, %v315
    %v321 = vadd.f32 %v275, %v318
    %322 = vset.pattern.permute.xlu0 6
    %323 = vperm.xlu0 %322, %v48
    %v324 = vpop.permute.xlu0 %323
    %325 = vset.pattern.permute.xlu0 6
    %326 = vperm.xlu0 %325, %v49
    %v327 = vpop.permute.xlu0 %326
    %vm328 = vcmp.eq.s32.totalorder %v324, %v47
    %vm329 = vcmp.eq.s32.totalorder %v327, %v47
    %v330 = vsel %vm328, 1.0, 0.0
    %v331 = vsel %vm329, 1.0, 0.0
    %s332 = scalar_lea.vmem [#allocation2], 192
    %v333 = vld [vmem:[%s332] sm:$0xff]
    %v334 = vld [vmem:[%s332 + $0x8] sm:$0xff]
    %v335 = vld [vmem:[%s332 + $0x10] sm:$0xff]
    %v336 = vld [vmem:[%s332 + $0x18] sm:$0xff]
    %v338 = vsel %vm79, %v330, 0
    %v341 = vsel %vm79, %v331, 0
    %343 = vmatpush.msra.mxu0 0.0
    %344 = vmatpush.msra.mxu0 0.0
    %345 = vmatpush.msra.mxu0 0.0
    %346 = vmatpush.msra.mxu0 0.0
    %347 = vmatpush.msra.mxu0 0.0
    %348 = vmatpush.msra.mxu0 0.0
    %349 = vmatpush.msra.mxu0 0.0
    %350 = vmatpush.msra.mxu0 0.0
    %351 = vmatpush.msra.mxu0 0.0
    %352 = vmatpush.msra.mxu0 0.0
    %353 = vmatpush.msra.mxu0 0.0
    %354 = vmatpush.msra.mxu0 0.0
    %355 = vmatpush.msra.mxu0 %v336
    %356 = vmatpush.msra.mxu0 %v335
    %357 = vmatpush.msra.mxu0 %v334
    %358 = vmatpush.msra.mxu0 %v333
    %359 = vmatmul.f32.gmra.mxu0 %v338
    %v360 = vpop.f32.mrf.mxu0
    %v361 = vadd.f32 0.0, %v360
    %362 = vmatmul.f32.gmra.mxu0 %v341
    %v363 = vpop.f32.mrf.mxu0
    %v364 = vadd.f32 0.0, %v363
    %365 = vdwg.mxu0
    %v366 = vadd.f32 %v320, %v361
    %v367 = vadd.f32 %v321, %v364
    %368 = vset.pattern.permute.xlu0 7
    %369 = vperm.xlu0 %368, %v48
    %v370 = vpop.permute.xlu0 %369
    %371 = vset.pattern.permute.xlu0 7
    %372 = vperm.xlu0 %371, %v49
    %v373 = vpop.permute.xlu0 %372
    %vm374 = vcmp.eq.s32.totalorder %v370, %v47
    %vm375 = vcmp.eq.s32.totalorder %v373, %v47
    %v376 = vsel %vm374, 1.0, 0.0
    %v377 = vsel %vm375, 1.0, 0.0
    %s378 = scalar_lea.vmem [#allocation2], 224
    %v379 = vld [vmem:[%s378] sm:$0xff]
    %v380 = vld [vmem:[%s378 + $0x8] sm:$0xff]
    %v381 = vld [vmem:[%s378 + $0x10] sm:$0xff]
    %v382 = vld [vmem:[%s378 + $0x18] sm:$0xff]
    %v384 = vsel %vm79, %v376, 0
    %v387 = vsel %vm79, %v377, 0
    %389 = vmatpush.msra.mxu0 0.0
    %390 = vmatpush.msra.mxu0 0.0
    %391 = vmatpush.msra.mxu0 0.0
    %392 = vmatpush.msra.mxu0 0.0
    %393 = vmatpush.msra.mxu0 0.0
    %394 = vmatpush.msra.mxu0 0.0
    %395 = vmatpush.msra.mxu0 0.0
    %396 = vmatpush.msra.mxu0 0.0
    %397 = vmatpush.msra.mxu0 0.0
    %398 = vmatpush.msra.mxu0 0.0
    %399 = vmatpush.msra.mxu0 0.0
    %400 = vmatpush.msra.mxu0 0.0
    %401 = vmatpush.msra.mxu0 %v382
    %402 = vmatpush.msra.mxu0 %v381
    %403 = vmatpush.msra.mxu0 %v380
    %404 = vmatpush.msra.mxu0 %v379
    %405 = vmatmul.f32.gmra.mxu0 %v384
    %v406 = vpop.f32.mrf.mxu0
    %v407 = vadd.f32 0.0, %v406
    %408 = vmatmul.f32.gmra.mxu0 %v387
    %v409 = vpop.f32.mrf.mxu0
    %v410 = vadd.f32 0.0, %v409
    %411 = vdwg.mxu0
    %v412 = vadd.f32 %v366, %v407
    %v413 = vadd.f32 %v367, %v410
    %v414 = vld [vmem:[%s3] sm:$0x1]
    %v416 = vperm.slane %v414, 0
    %v418 = vadd.f32 %v412, %v416
    %v419 = vadd.f32 %v413, %v416
    %v420 = vmax.f32 %v418, 0.0
    %v421 = vmax.f32 %v419, 0.0
    %424 = vrot.lane.b32.xlu0 %v420, 96
    %v425 = vpop.permute.xlu0 %424
    %426 = vrot.lane.b32.xlu0 %v421, 96
    %v427 = vpop.permute.xlu0 %426
    %v430 = vmax.f32 %v420, %v425
    %v431 = vmax.f32 %v421, %v427
    %432 = vrot.lane.b32.xlu0 %v420, 64
    %v433 = vpop.permute.xlu0 %432
    %434 = vrot.lane.b32.xlu0 %v421, 64
    %v435 = vpop.permute.xlu0 %434
    %v438 = vmax.f32 %v430, %v433
    %v439 = vmax.f32 %v431, %v435
    %440 = vrot.lane.b32.xlu0 %v420, 32
    %v441 = vpop.permute.xlu0 %440
    %442 = vrot.lane.b32.xlu0 %v421, 32
    %v443 = vpop.permute.xlu0 %442
    %v446 = vmax.f32 %v438, %v441
    %v447 = vmax.f32 %v439, %v443
    %v448 = vld [vmem:[%s0] sm:$0xf]
    %v449 = vld [vmem:[%s0 + $0x4] sm:$0xf]
    %v450 = vunpack.c.l.bf16 %v448
    %v451 = vunpack.c.l.bf16 %v449
    %v452 = vld [vmem:[%s4] sm:$0xff]
    %v453 = vld [vmem:[%s4 + $0x8] sm:$0xff]
    %v454 = vld [vmem:[%s4 + $0x10] sm:$0xff]
    %v455 = vld [vmem:[%s4 + $0x18] sm:$0xff]
    %v456 = vld [vmem:[%s4 + $0x20] sm:$0xff]
    %v457 = vld [vmem:[%s4 + $0x28] sm:$0xff]
    %v458 = vld [vmem:[%s4 + $0x30] sm:$0xff]
    %v459 = vld [vmem:[%s4 + $0x38] sm:$0xff]
    %v460 = vld [vmem:[%s5] sm:$0xff]
    %v461 = vld [vmem:[%s5 + $0x8] sm:$0xff]
    %v462 = vld [vmem:[%s5 + $0x10] sm:$0xff]
    %v463 = vld [vmem:[%s5 + $0x18] sm:$0xff]
    %v465 = vsel %vm79, %v446, 0
    %v468 = vsel %vm79, %v447, 0
    %470 = vmatpush.msra.mxu0 0.0
    %471 = vmatpush.msra.mxu0 0.0
    %472 = vmatpush.msra.mxu0 0.0
    %473 = vmatpush.msra.mxu0 0.0
    %474 = vmatpush.msra.mxu0 0.0
    %475 = vmatpush.msra.mxu0 0.0
    %476 = vmatpush.msra.mxu0 0.0
    %477 = vmatpush.msra.mxu0 0.0
    %478 = vmatpush.msra.mxu0 0.0
    %479 = vmatpush.msra.mxu0 0.0
    %480 = vmatpush.msra.mxu0 0.0
    %481 = vmatpush.msra.mxu0 0.0
    %482 = vmatpush.msra.mxu0 %v463
    %483 = vmatpush.msra.mxu0 %v462
    %484 = vmatpush.msra.mxu0 %v461
    %485 = vmatpush.msra.mxu0 %v460
    %486 = vmatmul.f32.gmra.mxu0 %v465
    %v487 = vpop.f32.mrf.mxu0
    %v488 = vadd.f32 0.0, %v487
    %489 = vmatmul.f32.gmra.mxu0 %v468
    %v490 = vpop.f32.mrf.mxu0
    %v491 = vadd.f32 0.0, %v490
    %492 = vdwg.mxu0
    %vm493 = vcmask 523264
    %v495 = vsel %vm493, %v450, 0
    %v498 = vsel %vm493, %v451, 0
    %500 = vmatpush.msra.mxu0 0.0
    %501 = vmatpush.msra.mxu0 0.0
    %502 = vmatpush.msra.mxu0 0.0
    %503 = vmatpush.msra.mxu0 0.0
    %504 = vmatpush.msra.mxu0 0.0
    %505 = vmatpush.msra.mxu0 0.0
    %506 = vmatpush.msra.mxu0 0.0
    %507 = vmatpush.msra.mxu0 0.0
    %508 = vmatpush.msra.mxu0 %v459
    %509 = vmatpush.msra.mxu0 %v458
    %510 = vmatpush.msra.mxu0 %v457
    %511 = vmatpush.msra.mxu0 %v456
    %512 = vmatpush.msra.mxu0 %v455
    %513 = vmatpush.msra.mxu0 %v454
    %514 = vmatpush.msra.mxu0 %v453
    %515 = vmatpush.msra.mxu0 %v452
    %516 = vmatmul.f32.gmra.mxu0 %v495
    %v517 = vpop.f32.mrf.mxu0
    %v518 = vadd.f32 %v488, %v517
    %519 = vmatmul.f32.gmra.mxu0 %v498
    %v520 = vpop.f32.mrf.mxu0
    %v521 = vadd.f32 %v491, %v520
    %522 = vdwg.mxu0
    %v523 = vld [vmem:[%s6] sm:$0xff]
    %v524 = vld [vmem:[%s6 + $0x8] sm:$0xff]
    %v525 = vld [vmem:[%s6 + $0x10] sm:$0xff]
    %v526 = vld [vmem:[%s6 + $0x18] sm:$0xff]
    %v527 = vld [vmem:[%s7] sm:$0x1]
    %v529 = vperm.slane %v527, 0
    %v532 = vsel %vm79, %v518, 0
    %v535 = vsel %vm79, %v521, 0
    %537 = vmatpush.msra.mxu0 0.0
    %538 = vmatpush.msra.mxu0 0.0
    %539 = vmatpush.msra.mxu0 0.0
    %540 = vmatpush.msra.mxu0 0.0
    %541 = vmatpush.msra.mxu0 0.0
    %542 = vmatpush.msra.mxu0 0.0
    %543 = vmatpush.msra.mxu0 0.0
    %544 = vmatpush.msra.mxu0 0.0
    %545 = vmatpush.msra.mxu0 0.0
    %546 = vmatpush.msra.mxu0 0.0
    %547 = vmatpush.msra.mxu0 0.0
    %548 = vmatpush.msra.mxu0 0.0
    %549 = vmatpush.msra.mxu0 %v526
    %550 = vmatpush.msra.mxu0 %v525
    %551 = vmatpush.msra.mxu0 %v524
    %552 = vmatpush.msra.mxu0 %v523
    %553 = vmatmul.f32.gmra.mxu0 %v532
    %v554 = vpop.f32.mrf.mxu0
    %v555 = vadd.f32 %v529, %v554
    %556 = vmatmul.f32.gmra.mxu0 %v535
    %v557 = vpop.f32.mrf.mxu0
    %v558 = vadd.f32 %v529, %v557
    %559 = vdwg.mxu0
    %v560 = vxor.u32 %v555, 2147483648
    %v561 = vxor.u32 %v558, 2147483648
    %v562 = vmul.f32 %v560, 1.442695
    %v563 = vpow.pop %v562
    %v564 = vmul.f32 %v561, 1.442695
    %v565 = vpow.pop %v564
    %v566 = vadd.f32 %v563, 1.0
    %v567 = vadd.f32 %v565, 1.0
    %v568 = vrcp.pop %v566
    %v569 = vmul.f32 %v566, %v568
    %v570 = vsub.f32 1.0, %v569
    %v571 = vmul.f32 %v568, %v570
    %v572 = vadd.f32 %v568, %v571
    %vm573 = vweird.f32 %v566
    %vm574 = vweird.f32 %v568
    %vm575 = vmor %vm573, %vm574
    %v576 = vsel %vm575, %v568, %v572
    %v577 = vand.u32 2147483647, %v566
    %vm578 = vcmp.eq.f32.partialorder %v577, 8.507059e+37
    %v579 = vand.u32 %v566, 2147483648
    %v580 = vor.u32 1.1754944e-38, %v579
    %v581 = vsel %vm578, %v580, %v576
    %v582 = vmul.f32 1.0, %v581
    %v583 = vrcp.pop %v567
    %v584 = vmul.f32 %v567, %v583
    %v585 = vsub.f32 1.0, %v584
    %v586 = vmul.f32 %v583, %v585
    %v587 = vadd.f32 %v583, %v586
    %vm588 = vweird.f32 %v567
    %vm589 = vweird.f32 %v583
    %vm590 = vmor %vm588, %vm589
    %v591 = vsel %vm590, %v583, %v587
    %v592 = vand.u32 2147483647, %v567
    %vm593 = vcmp.eq.f32.partialorder %v592, 8.507059e+37
    %v594 = vand.u32 %v567, 2147483648
    %v595 = vor.u32 1.1754944e-38, %v594
    %v596 = vsel %vm593, %v595, %v591
    %v597 = vmul.f32 1.0, %v596
    %v598 = vmax.f32 %v555, 0.0
    %v599 = vmax.f32 %v558, 0.0
    %602 = vrot.lane.b32.xlu0 %v598, 96
    %v603 = vpop.permute.xlu0 %602
    %604 = vrot.lane.b32.xlu0 %v599, 96
    %v605 = vpop.permute.xlu0 %604
    %v608 = vmul.f32 %v582, %v603
    %v609 = vmul.f32 %v597, %v605
    %v610 = vsub.f32 1.0, %v582
    %v611 = vsub.f32 1.0, %v597
    %v612 = vmul.f32 %v610, %v518
    %v613 = vmul.f32 %v611, %v521
    %v614 = vadd.f32 %v608, %v612
    %v615 = vadd.f32 %v609, %v613
    %s616 = scalar_lea.vmem %s6, 32
    %v617 = vld [vmem:[%s616] sm:$0xff]
    %v618 = vld [vmem:[%s616 + $0x8] sm:$0xff]
    %v619 = vld [vmem:[%s616 + $0x10] sm:$0xff]
    %v620 = vld [vmem:[%s616 + $0x18] sm:$0xff]
    %s621 = scalar_lea.vmem %s7, 1
    %v622 = vld [vmem:[%s621] sm:$0x1]
    %v624 = vperm.slane %v622, 0
    %v627 = vsel %vm79, %v614, 0
    %v630 = vsel %vm79, %v615, 0
    %632 = vmatpush.msra.mxu0 0.0
    %633 = vmatpush.msra.mxu0 0.0
    %634 = vmatpush.msra.mxu0 0.0
    %635 = vmatpush.msra.mxu0 0.0
    %636 = vmatpush.msra.mxu0 0.0
    %637 = vmatpush.msra.mxu0 0.0
    %638 = vmatpush.msra.mxu0 0.0
    %639 = vmatpush.msra.mxu0 0.0
    %640 = vmatpush.msra.mxu0 0.0
    %641 = vmatpush.msra.mxu0 0.0
    %642 = vmatpush.msra.mxu0 0.0
    %643 = vmatpush.msra.mxu0 0.0
    %644 = vmatpush.msra.mxu0 %v620
    %645 = vmatpush.msra.mxu0 %v619
    %646 = vmatpush.msra.mxu0 %v618
    %647 = vmatpush.msra.mxu0 %v617
    %648 = vmatmul.f32.gmra.mxu0 %v627
    %v649 = vpop.f32.mrf.mxu0
    %v650 = vadd.f32 %v624, %v649
    %651 = vmatmul.f32.gmra.mxu0 %v630
    %v652 = vpop.f32.mrf.mxu0
    %v653 = vadd.f32 %v624, %v652
    %654 = vdwg.mxu0
    %v655 = vxor.u32 %v650, 2147483648
    %v656 = vxor.u32 %v653, 2147483648
    %v657 = vmul.f32 %v655, 1.442695
    %v658 = vpow.pop %v657
    %v659 = vmul.f32 %v656, 1.442695
    %v660 = vpow.pop %v659
    %v661 = vadd.f32 %v658, 1.0
    %v662 = vadd.f32 %v660, 1.0
    %v663 = vrcp.pop %v661
    %v664 = vmul.f32 %v661, %v663
    %v665 = vsub.f32 1.0, %v664
    %v666 = vmul.f32 %v663, %v665
    %v667 = vadd.f32 %v663, %v666
    %vm668 = vweird.f32 %v661
    %vm669 = vweird.f32 %v663
    %vm670 = vmor %vm668, %vm669
    %v671 = vsel %vm670, %v663, %v667
    %v672 = vand.u32 2147483647, %v661
    %vm673 = vcmp.eq.f32.partialorder %v672, 8.507059e+37
    %v674 = vand.u32 %v661, 2147483648
    %v675 = vor.u32 1.1754944e-38, %v674
    %v676 = vsel %vm673, %v675, %v671
    %v677 = vmul.f32 1.0, %v676
    %v678 = vrcp.pop %v662
    %v679 = vmul.f32 %v662, %v678
    %v680 = vsub.f32 1.0, %v679
    %v681 = vmul.f32 %v678, %v680
    %v682 = vadd.f32 %v678, %v681
    %vm683 = vweird.f32 %v662
    %vm684 = vweird.f32 %v678
    %vm685 = vmor %vm683, %vm684
    %v686 = vsel %vm685, %v678, %v682
    %v687 = vand.u32 2147483647, %v662
    %vm688 = vcmp.eq.f32.partialorder %v687, 8.507059e+37
    %v689 = vand.u32 %v662, 2147483648
    %v690 = vor.u32 1.1754944e-38, %v689
    %v691 = vsel %vm688, %v690, %v686
    %v692 = vmul.f32 1.0, %v691
    %v693 = vmax.f32 %v650, 0.0
    %v694 = vmax.f32 %v653, 0.0
    %697 = vrot.lane.b32.xlu0 %v693, 96
    %v698 = vpop.permute.xlu0 %697
    %699 = vrot.lane.b32.xlu0 %v694, 96
    %v700 = vpop.permute.xlu0 %699
    %v703 = vmul.f32 %v677, %v698
    %v704 = vmul.f32 %v692, %v700
    %v705 = vsub.f32 1.0, %v677
    %v706 = vsub.f32 1.0, %v692
    %v707 = vmul.f32 %v705, %v614
    %v708 = vmul.f32 %v706, %v615
    %v709 = vadd.f32 %v703, %v707
    %v710 = vadd.f32 %v704, %v708
    %711 = vst.msk [vmem:[#allocation5] sm:$0xff] %vm79, %v709
    %712 = vst.msk [vmem:[#allocation5 + $0x8] sm:$0xff] %vm79, %v710
    // Predicated region
    $region38: #{tpu_custom_call.1} parent=1 // pred_check
      _
    $region39: #{tpu_custom_call.1} parent=1 // pred_check_branch
      %714 = sbr.rel (0) target = $region41
    $region40: #{tpu_custom_call.1} parent=1 // pred_region
      %716 = vsyncadd [#allocation4], 0
      %s717 = sshll.u32 [#allocation5], 4
      %s718 = int_to_ptr.vmem [resolvable:$true] %s717
      %s719 = sshll.u32 %s8, 4
      %s720 = int_to_ptr.hbm [resolvable:$true] %s719
      %725 = dma.vmem_to_hbm [thread:$0]  %s718, 256, %s720, [#allocation4], 128, 128, 8
    $region41: #{tpu_custom_call.1} parent=1 // pred_fallthru
      _
    // Predicated region
    $region42: #{tpu_custom_call.1} parent=1 // pred_check
      _
    $region43: #{tpu_custom_call.1} parent=1 // pred_check_branch
      %727 = sbr.rel (0) target = $region45
    $region44: #{tpu_custom_call.1} parent=1 // pred_region
      %729 = dma.done [#allocation4], 256
    $region45: #{tpu_custom_call.1} parent=1 // pred_fallthru
      _
    %730 = vsyncpa [#allocation3], 1
    %731 = vsyncpa [#allocation4], 1

</llo_original>
